<compile_context>
chip_gen: v7x
topology: tpu7x:2x2x1
jax: 0.10.0
libtpu: 0.0.40
codegen_flags: <defaults>
</compile_context>

<pallas_src>
import jax
import jax.numpy as jnp
from jax.experimental import pallas as pl
from jax.experimental.pallas import tpu as pltpu

_MIB = 1024 * 1024


def _round_up(x, m):
    return ((x + m - 1) // m) * m


def _vmem_plan():
    """Generation-aware (plan_budget_bytes, vmem_limit_bytes)."""
    phys = None
    get_info = getattr(pltpu, "get_tpu_info", None)
    if get_info is not None:
        try:
            phys = getattr(get_info(), "vmem_capacity_bytes", None)
        except Exception:
            phys = None
    if not phys or phys < 32 * _MIB:
        phys = 64 * _MIB        # conservative fallback: assume the smallest (v7x) VMEM
    if phys <= 64 * _MIB:
        plan = 40 * _MIB        # v7x: 64 MiB physical -> keep the whole plan well under 48 MiB
    else:
        plan = 64 * _MIB        # v5e / v6e: 128 MiB physical -> raise above 16/32 MiB defaults
    limit = max(32 * _MIB, min(plan + 16 * _MIB, phys - 16 * _MIB))
    return plan, limit


# ---------------------------------------------------------------------------
# Kernels
# ---------------------------------------------------------------------------
def _fused_kernel(seq_ref, vec_ref, mask_ref, out_ref, attn_ref):
    # seq_ref: (TB, L, D)  vec_ref: (TB, D)  mask_ref: (TB, L)
    seq = seq_ref[...]                                      # input dtype
    vec = vec_ref[...]                                      # input dtype
    mask = mask_ref[...].astype(jnp.float32)

    # sim[b, l] = <seq[b, l, :], vec[b, :]>: VPU broadcast multiply in the input
    # dtype, lane reduce accumulated in f32 (no full-tile f32 copy of seq).
    sim = jnp.sum(seq * vec[:, None, :], axis=-1, dtype=jnp.float32)   # (TB, L)

    # masked_softmax: softmax(sim*mask)*mask, renormalized; fused to one divide:
    # p = (e*mask) / (sum(e*mask) + 1e-13 * sum(e)).
    sim_m = sim * mask
    sim_max = jnp.max(sim_m, axis=-1, keepdims=True)
    e = jnp.exp(sim_m - sim_max)
    s1 = jnp.sum(e, axis=-1, keepdims=True)
    em = e * mask
    s2 = jnp.sum(em, axis=-1, keepdims=True)
    p = em / (s2 + 1e-13 * s1)                              # (TB, L) f32

    # pooled[b, :] = sum_l p[b, l] * seq[b, l, :]: multiply in input dtype,
    # sublane reduce accumulated in f32.
    pooled = jnp.sum(p.astype(seq.dtype)[:, :, None] * seq, axis=1,
                     dtype=jnp.float32)                     # (TB, D)

    out_ref[...] = pooled.astype(out_ref.dtype)
    attn_ref[...] = p.astype(attn_ref.dtype)


def _sim_kernel(seq_ref, vec_ref, sim_ref):
    # seq_ref: (TB, LC, D)  vec_ref: (TB, D)  sim_ref: (TB, LC)
    seq = seq_ref[...]
    vec = vec_ref[...]
    sim_ref[...] = jnp.sum(seq * vec[:, None, :], axis=-1, dtype=jnp.float32)


def _pool_kernel(seq_ref, attn_ref, out_ref, acc_ref):
    # Accumulate pooled over the L grid axis (axis 1, "arbitrary").
    @pl.when(pl.program_id(1) == 0)
    def _init():
        acc_ref[...] = jnp.zeros_like(acc_ref)

    seq = seq_ref[...]                                      # (TB, LC, D)
    p = attn_ref[...].astype(seq.dtype)                     # (TB, LC)
    acc_ref[...] += jnp.sum(p[:, :, None] * seq, axis=1, dtype=jnp.float32)

    @pl.when(pl.program_id(1) == pl.num_programs(1) - 1)
    def _finalize():
        out_ref[...] = acc_ref[...].astype(out_ref.dtype)


# ---------------------------------------------------------------------------
# Tile planning
# ---------------------------------------------------------------------------
def _plan(B, L, D, in_dtype, out_dtype):
    it = jnp.dtype(in_dtype).itemsize
    ot = jnp.dtype(out_dtype).itemsize
    plan_budget, vmem_limit = _vmem_plan()

    Dl = _round_up(D, 128)   # lane-padded feature dim
    Ls = _round_up(L, 8)     # sublane-padded length dim (3-D seq tiles)
    Ll = _round_up(L, 128)   # lane-padded length dim (2-D mask / attn tiles)

    # Fused-path VMEM per batch row: double-buffered seq tile (input dtype) plus
    # ~2 live f32-sized (L, D) temporaries (conservative: also covers v5e's
    # bf16->f32 upcast), plus double-buffered vec/mask/pooled/attn rows and a
    # few (L,)/(D,) f32 row temporaries.
    per_row = (Ls * Dl * (2 * it + 8)
               + 2 * Dl * (it + ot) + 4 * Dl
               + 2 * Ll * (it + ot) + 6 * Ll * 4)
    tb_budget = int(plan_budget // per_row)

    fused_ok = tb_budget >= (B if B <= 8 else 8)
    if fused_ok:
        if B <= 8:
            tb = B                                   # full-dim block: always layout-legal
        else:
            tb = min(tb_budget, _round_up(B, 8), 1024)
            tb = (tb // 8) * 8                       # sublane-aligned batch tile
            if B >= 16:
                # Keep >= 2 grid steps (~4 ideally): megacore sharding on
                # v7x's 2 TCs and DMA/compute overlap need a multi-block grid.
                tb = min(tb, max(8, _round_up(-(-B // 4), 8)))
        return "fused", int(tb), None, int(vmem_limit)

    # L-tiled fallback: even a small batch tile with the full L does not fit.
    denom = 8 * Dl * (2 * it + 8)
    lc = max(128, (int(plan_budget // max(denom, 1)) // 128) * 128)
    lc = min(lc, Ll)
    per_chunk_row = (lc * Dl * (2 * it + 8)
                     + 2 * Dl * (it + ot) + 4 * Dl
                     + 2 * lc * (it + ot + 4))
    tb = int(min(max(plan_budget // per_chunk_row, 1), 256))
    if B <= 8:
        tb = B
    else:
        tb = max(8, (min(tb, _round_up(B, 8)) // 8) * 8)
    # TODO(synk): for extremely large D even an (8, 128, D) tile may exceed the
    # budget; a feature-dim (D) tiling pass would be required in that regime.
    return "l_tiled", int(tb), int(lc), int(vmem_limit)


# ---------------------------------------------------------------------------
# Wrappers
# ---------------------------------------------------------------------------
def _run_fused(seq, vec, mask, tb, vmem_limit, out_dtype):
    B, L, D = seq.shape
    b_padded = _round_up(B, tb)
    if b_padded != B:
        pad = b_padded - B
        # Zero-padded rows are harmless: mask=0 -> attn=0 -> pooled=0; sliced off.
        seq = jnp.pad(seq, ((0, pad), (0, 0), (0, 0)))
        vec = jnp.pad(vec, ((0, pad), (0, 0)))
        mask = jnp.pad(mask, ((0, pad), (0, 0)))
    n_blocks = b_padded // tb

    pooled, attn = pl.pallas_call(
        _fused_kernel,
        out_shape=(
            jax.ShapeDtypeStruct((b_padded, D), out_dtype),
            jax.ShapeDtypeStruct((b_padded, L), out_dtype),
        ),
        grid_spec=pltpu.PrefetchScalarGridSpec(
            num_scalar_prefetch=0,
            grid=(n_blocks,),
            in_specs=[
                pl.BlockSpec((tb, L, D), lambda b: (b, 0, 0)),
                pl.BlockSpec((tb, D), lambda b: (b, 0)),
                pl.BlockSpec((tb, L), lambda b: (b, 0)),
            ],
            out_specs=[
                pl.BlockSpec((tb, D), lambda b: (b, 0)),
                pl.BlockSpec((tb, L), lambda b: (b, 0)),
            ],
        ),
        compiler_params=pltpu.CompilerParams(
            dimension_semantics=("parallel",),
            vmem_limit_bytes=int(vmem_limit),
        ),
    )(seq, vec, mask)
    return pooled[:B], attn[:B]


def _run_l_tiled(seq, vec, mask, tb, lc, vmem_limit, out_dtype):
    B, L, D = seq.shape
    b_padded = _round_up(B, tb)
    l_padded = _round_up(L, lc)
    pad_b, pad_l = b_padded - B, l_padded - L
    if pad_b or pad_l:
        seq = jnp.pad(seq, ((0, pad_b), (0, pad_l), (0, 0)))
        vec = jnp.pad(vec, ((0, pad_b), (0, 0)))
        mask = jnp.pad(mask, ((0, pad_b), (0, pad_l)))
    nb, nl = b_padded // tb, l_padded // lc

    # Pass 1: similarity logits (each output block written exactly once).
    sim = pl.pallas_call(
        _sim_kernel,
        out_shape=jax.ShapeDtypeStruct((b_padded, l_padded), jnp.float32),
        grid_spec=pltpu.PrefetchScalarGridSpec(
            num_scalar_prefetch=0,
            grid=(nb, nl),
            in_specs=[
                pl.BlockSpec((tb, lc, D), lambda b, l: (b, l, 0)),
                pl.BlockSpec((tb, D), lambda b, l: (b, 0)),
            ],
            out_specs=pl.BlockSpec((tb, lc), lambda b, l: (b, l)),
        ),
        compiler_params=pltpu.CompilerParams(
            dimension_semantics=("parallel", "parallel"),
            vmem_limit_bytes=int(vmem_limit),
        ),
    )(seq, vec)

    # Masked softmax on the (B, L) logits: tiny vs. the (B, L, D) sequence
    # traffic, so plain XLA is fine here (padded positions have mask=0).
    mask_f = mask.astype(jnp.float32)
    sim_m = sim * mask_f
    sim_max = jnp.max(sim_m, axis=-1, keepdims=True)
    e = jnp.exp(sim_m - sim_max)
    s1 = jnp.sum(e, axis=-1, keepdims=True)
    em = e * mask_f
    s2 = jnp.sum(em, axis=-1, keepdims=True)
    attn_full = (em / (s2 + 1e-13 * s1)).astype(out_dtype)

    # Pass 2: attention pooling, reduction over the L grid axis.
    pooled = pl.pallas_call(
        _pool_kernel,
        out_shape=jax.ShapeDtypeStruct((b_padded, D), out_dtype),
        grid_spec=pltpu.PrefetchScalarGridSpec(
            num_scalar_prefetch=0,
            grid=(nb, nl),
            in_specs=[
                pl.BlockSpec((tb, lc, D), lambda b, l: (b, l, 0)),
                pl.BlockSpec((tb, lc), lambda b, l: (b, l)),
            ],
            out_specs=pl.BlockSpec((tb, D), lambda b, l: (b, 0)),
            scratch_shapes=[pltpu.VMEM((tb, D), jnp.float32)],
        ),
        compiler_params=pltpu.CompilerParams(
            dimension_semantics=("parallel", "arbitrary"),
            vmem_limit_bytes=int(vmem_limit),
        ),
    )(seq, attn_full)

    return pooled[:B], attn_full[:B, :L]


def unidir_attention_itr(sequence, vector, sequence_mask, *, force_l_tiled=False):
    """sequence: (B, L, D), vector: (B, D), mask: (B, L). Returns (pooled, attn)."""
    B, L, D = sequence.shape
    assert vector.shape == (B, D)
    assert sequence_mask.shape == (B, L)
    out_dtype = sequence.dtype
    mask = sequence_mask.astype(sequence.dtype)

    mode, tb, lc, vmem_limit = _plan(B, L, D, sequence.dtype, out_dtype)
    if force_l_tiled and mode == "fused":
        mode = "l_tiled"
        lc = min(128, _round_up(L, 128))

    if mode == "fused":
        return _run_fused(sequence, vector, mask, tb, vmem_limit, out_dtype)
    return _run_l_tiled(sequence, vector, mask, tb, lc, vmem_limit, out_dtype)


def _reference(sequence, vector, sequence_mask):
    hi = jax.lax.Precision.HIGHEST
    sim = jnp.einsum("bld,bd->bl", sequence, vector, precision=hi)
    sim_m = sim * sequence_mask
    p = jax.nn.softmax(sim_m, axis=-1)
    p = p * sequence_mask
    p = p / (jnp.sum(p, axis=-1, keepdims=True) + 1e-13)
    pooled = jnp.einsum("bl,bld->bd", p, sequence, precision=hi)
    return pooled, p


if __name__ == "__main__":
    # Case 1: small shapes -> fused single-kernel path.  B=10 is deliberately
    # not a multiple of 8 to exercise batch padding / alignment.
    key = jax.random.PRNGKey(0)
    B, L, D = 10, 8, 32
    k1, k2 = jax.random.split(key)
    sequence = jax.random.normal(k1, (B, L, D), dtype=jnp.float32)
    vector = jax.random.normal(k2, (B, D), dtype=jnp.float32)
    sequence_mask = jnp.ones((B, L), dtype=jnp.float32)
    sequence_mask = sequence_mask.at[1, L - 3:].set(0.0)
    sequence_mask = sequence_mask.at[4, : L // 2].set(0.0)

    pooled, attn = unidir_attention_itr(sequence, vector, sequence_mask)
    jax.block_until_ready((pooled, attn))
    ref_pooled, ref_attn = _reference(sequence, vector, sequence_mask)
    assert jnp.allclose(pooled, ref_pooled, atol=1e-5, rtol=1e-5), "pooled mismatch (fused)"
    assert jnp.allclose(attn, ref_attn, atol=1e-5, rtol=1e-5), "attn mismatch (fused)"

    # Case 2: force the L-tiled fallback path (exercises padding along B and L,
    # the two-pass sequence read, and the grid-level reduction in the pooler).
    B2, L2, D2 = 12, 160, 96
    k3, k4, k5 = jax.random.split(jax.random.PRNGKey(1), 3)
    seq2 = jax.random.normal(k3, (B2, L2, D2), dtype=jnp.float32)
    vec2 = 0.25 * jax.random.normal(k4, (B2, D2), dtype=jnp.float32)
    mask2 = (jax.random.uniform(k5, (B2, L2)) > 0.2).astype(jnp.float32)

    pooled2, attn2 = unidir_attention_itr(seq2, vec2, mask2, force_l_tiled=True)
    jax.block_until_ready((pooled2, attn2))
    ref_pooled2, ref_attn2 = _reference(seq2, vec2, mask2)
    assert jnp.allclose(pooled2, ref_pooled2, atol=1e-4, rtol=1e-4), "pooled mismatch (l-tiled)"
    assert jnp.allclose(attn2, ref_attn2, atol=1e-5, rtol=1e-4), "attn mismatch (l-tiled)"

    print("KERNEL_OK")
</pallas_src>

<mosaic_0001>
module attributes {stable_mosaic.version = 11 : i64} {
  func.func @_fused_kernel(%arg0: i32, %arg1: memref<16x8x32xf32, #tpu.memory_space<vmem>>, %arg2: memref<16x32xf32, #tpu.memory_space<vmem>>, %arg3: memref<16x8xf32, #tpu.memory_space<vmem>>, %arg4: memref<16x32xf32, #tpu.memory_space<vmem>>, %arg5: memref<16x8xf32, #tpu.memory_space<vmem>>) attributes {dimension_semantics = [#tpu.dimension_semantics<parallel>], iteration_bounds = array<i64: 1>, scalar_prefetch = 0 : i64, scratch_operands = 0 : i64, tpu.core_type = #tpu.core_type<tc>, window_params = [{transform_indices = @transform_0, window_bounds = array<i64: 16, 8, 32>}, {transform_indices = @transform_1, window_bounds = array<i64: 16, 32>}, {transform_indices = @transform_2, window_bounds = array<i64: 16, 8>}, {transform_indices = @transform_3, window_bounds = array<i64: 16, 32>}, {transform_indices = @transform_4, window_bounds = array<i64: 16, 8>}]} {
    %c0 = arith.constant 0 : index
    %c0_0 = arith.constant 0 : index
    %c0_1 = arith.constant 0 : index
    %0 = vector.load %arg1[%c0, %c0_0, %c0_1] : memref<16x8x32xf32, #tpu.memory_space<vmem>>, vector<16x8x32xf32>
    %c0_2 = arith.constant 0 : index
    %c0_3 = arith.constant 0 : index
    %1 = vector.load %arg2[%c0_2, %c0_3] : memref<16x32xf32, #tpu.memory_space<vmem>>, vector<16x32xf32>
    %c0_4 = arith.constant 0 : index
    %c0_5 = arith.constant 0 : index
    %2 = vector.load %arg3[%c0_4, %c0_5] : memref<16x8xf32, #tpu.memory_space<vmem>>, vector<16x8xf32>
    %3 = vector.shape_cast %1 : vector<16x32xf32> to vector<16x1x32xf32>
    %4 = vector.broadcast %3 : vector<16x1x32xf32> to vector<16x8x32xf32>
    %5 = arith.mulf %0, %4 : vector<16x8x32xf32>
    %cst = arith.constant dense<0.000000e+00> : vector<16x8xf32>
    %6 = vector.multi_reduction <add>, %5, %cst [2] : vector<16x8x32xf32> to vector<16x8xf32>
    %7 = arith.mulf %6, %2 : vector<16x8xf32>
    %cst_6 = arith.constant dense<0xFF800000> : vector<16xf32>
    %8 = vector.multi_reduction <maximumf>, %7, %cst_6 [1] : vector<16x8xf32> to vector<16xf32>
    %9 = vector.shape_cast %8 : vector<16xf32> to vector<16x1xf32>
    %10 = vector.broadcast %9 : vector<16x1xf32> to vector<16x8xf32>
    %11 = arith.subf %7, %10 : vector<16x8xf32>
    %12 = math.exp %11 : vector<16x8xf32>
    %cst_7 = arith.constant dense<0.000000e+00> : vector<16xf32>
    %13 = vector.multi_reduction <add>, %12, %cst_7 [1] : vector<16x8xf32> to vector<16xf32>
    %14 = vector.shape_cast %13 : vector<16xf32> to vector<16x1xf32>
    %15 = arith.mulf %12, %2 : vector<16x8xf32>
    %cst_8 = arith.constant dense<0.000000e+00> : vector<16xf32>
    %16 = vector.multi_reduction <add>, %15, %cst_8 [1] : vector<16x8xf32> to vector<16xf32>
    %17 = vector.shape_cast %16 : vector<16xf32> to vector<16x1xf32>
    %cst_9 = arith.constant 9.99999982E-14 : f32
    %18 = vector.broadcast %cst_9 : f32 to vector<16x1xf32>
    %19 = arith.mulf %18, %14 : vector<16x1xf32>
    %20 = arith.addf %17, %19 : vector<16x1xf32>
    %21 = vector.broadcast %20 : vector<16x1xf32> to vector<16x8xf32>
    %22 = arith.divf %15, %21 : vector<16x8xf32>
    %23 = vector.shape_cast %22 : vector<16x8xf32> to vector<16x8x1xf32>
    %24 = vector.broadcast %23 : vector<16x8x1xf32> to vector<16x8x32xf32>
    %25 = arith.mulf %24, %0 : vector<16x8x32xf32>
    %cst_10 = arith.constant dense<0.000000e+00> : vector<16x32xf32>
    %26 = vector.multi_reduction <add>, %25, %cst_10 [1] : vector<16x8x32xf32> to vector<16x32xf32>
    %c0_11 = arith.constant 0 : index
    %c0_12 = arith.constant 0 : index
    %27 = vector.load %arg4[%c0_11, %c0_12] : memref<16x32xf32, #tpu.memory_space<vmem>>, vector<16x32xf32>
    tpu.vector_store %arg4[%c0_11, %c0_12], %26 {strides = array<i32>} : memref<16x32xf32, #tpu.memory_space<vmem>>, vector<16x32xf32>,
    %c0_13 = arith.constant 0 : index
    %c0_14 = arith.constant 0 : index
    %28 = vector.load %arg5[%c0_13, %c0_14] : memref<16x8xf32, #tpu.memory_space<vmem>>, vector<16x8xf32>
    tpu.vector_store %arg5[%c0_13, %c0_14], %22 {strides = array<i32>} : memref<16x8xf32, #tpu.memory_space<vmem>>, vector<16x8xf32>,
    return
  }
  func.func @transform_0(%arg0: i32) -> (i32, i32, i32) {
    %c0_i32 = arith.constant 0 : i32
    %c0_i32_0 = arith.constant 0 : i32
    %c0_i32_1 = arith.constant 0 : i32
    return %arg0, %c0_i32, %c0_i32_0 : i32, i32, i32
  }
  func.func @transform_1(%arg0: i32) -> (i32, i32) {
    %c0_i32 = arith.constant 0 : i32
    %c0_i32_0 = arith.constant 0 : i32
    return %arg0, %c0_i32 : i32, i32
  }
  func.func @transform_2(%arg0: i32) -> (i32, i32) {
    %c0_i32 = arith.constant 0 : i32
    %c0_i32_0 = arith.constant 0 : i32
    return %arg0, %c0_i32 : i32, i32
  }
  func.func @transform_3(%arg0: i32) -> (i32, i32) {
    %c0_i32 = arith.constant 0 : i32
    %c0_i32_0 = arith.constant 0 : i32
    return %arg0, %c0_i32 : i32, i32
  }
  func.func @transform_4(%arg0: i32) -> (i32, i32) {
    %c0_i32 = arith.constant 0 : i32
    %c0_i32_0 = arith.constant 0 : i32
    return %arg0, %c0_i32 : i32, i32
  }
}

</mosaic_0001>

<llo_original>
// kernel: tpu_custom_call.1
$region0: #{tpu_custom_call.1}
  #allocation0 [shape = 'u32[]', space=smem, size = 0x4, offset = 0x4, fixed_abs, tag = 'smem constant byte address 0x4 - core index']
  #allocation1 [shape = 'u32[144,128]{1,0:T(1,128)}', space=vmem, size = 0x12000, scoped, tag = 'internal scratch']
  %s0 = inlined_call_operand.hbm [shape: f32[16,8,32], index: 0, kind: input, shape index: {}]
  %s1 = inlined_call_operand.vmem [shape: f32[16,32], index: 1, kind: input, shape index: {}]
  %s2 = inlined_call_operand.vmem [shape: f32[16,8], index: 2, kind: input, shape index: {}]
  %s3 = inlined_call_operand.hbm [shape: f32[16,32], index: 3, kind: output, shape index: {0}]
  %s4 = inlined_call_operand.vmem [shape: f32[16,8], index: 4, kind: output, shape index: {1}]
  %5 = xla_tuple %s3, %s4
  %s6 = sld [smem:[#allocation0]]
  $region34: #{tpu_custom_call.1} parent=0
    _
  %s8 = ssub.s32 1, %s6
  %s9 = scalar_select 0, %s8, %s6
  $region1: #{tpu_custom_call.1} parent=0
    #allocation2 [shape = 'u8[65536]{0}', space=vmem, size = 0x10000, scoped, tag = 'input window, operand 0, single buffered']
    #allocation3 [shape = 's32[1]{0}', space=sflag, size = 0x4, scoped, tag = 'scoped memory for tpu_custom_call.1']
    #allocation4 [shape = 's32[1]{0}', space=sflag, size = 0x4, scoped, tag = 'scoped memory for tpu_custom_call.1']
    #allocation5 [shape = 'u8[8192]{0}', space=vmem, size = 0x2000, scoped, tag = 'output window, operand 0, single buffered']
    %10 = vsyncpa [#allocation3], 0
    %11 = vsyncpa [#allocation4], 0
    // Predicated region
    $region2: #{tpu_custom_call.1} parent=1 // pred_check
      _
    $region3: #{tpu_custom_call.1} parent=1 // pred_check_branch
      %13 = sbr.rel (0) target = $region5
    $region4: #{tpu_custom_call.1} parent=1 // pred_region
      %s15 = ssub.s32 2048, 2048
      %16 = vsyncadd [#allocation3], %s15
      %s17 = sshll.u32 [#allocation2], 4
      %s18 = int_to_ptr.vmem [resolvable:$true] %s17
      %23 = dma.hbm_to_vmem [thread:$0]  %s0, 2048, %s18, [#allocation3], 128, 128, 8
    $region5: #{tpu_custom_call.1} parent=1 // pred_fallthru
      _
    // Predicated region
    $region6: #{tpu_custom_call.1} parent=1 // pred_check
      _
    $region7: #{tpu_custom_call.1} parent=1 // pred_check_branch
      %25 = sbr.rel (0) target = $region9
    $region8: #{tpu_custom_call.1} parent=1 // pred_region
      _
    $region9: #{tpu_custom_call.1} parent=1 // pred_fallthru
      _
    // Predicated region
    $region10: #{tpu_custom_call.1} parent=1 // pred_check
      _
    $region11: #{tpu_custom_call.1} parent=1 // pred_check_branch
      %27 = sbr.rel (0) target = $region13
    $region12: #{tpu_custom_call.1} parent=1 // pred_region
      _
    $region13: #{tpu_custom_call.1} parent=1 // pred_fallthru
      _
    // Predicated region
    $region14: #{tpu_custom_call.1} parent=1 // pred_check
      _
    $region15: #{tpu_custom_call.1} parent=1 // pred_check_branch
      %29 = sbr.rel (0) target = $region17
    $region16: #{tpu_custom_call.1} parent=1 // pred_region
      %30 = dma.done [#allocation3], 2048
    $region17: #{tpu_custom_call.1} parent=1 // pred_fallthru
      _
    %v31 = vld [vmem:[#allocation2] sm:$0xff]
    %v32 = vld [vmem:[#allocation2 + $0x8] sm:$0xff]
    %v33 = vld [vmem:[#allocation2 + $0x10] sm:$0xff]
    %v34 = vld [vmem:[#allocation2 + $0x18] sm:$0xff]
    %v35 = vld [vmem:[#allocation2 + $0x20] sm:$0xff]
    %v36 = vld [vmem:[#allocation2 + $0x28] sm:$0xff]
    %v37 = vld [vmem:[#allocation2 + $0x30] sm:$0xff]
    %v38 = vld [vmem:[#allocation2 + $0x38] sm:$0xff]
    %v39 = vld [vmem:[#allocation2 + $0x40] sm:$0xff]
    %v40 = vld [vmem:[#allocation2 + $0x48] sm:$0xff]
    %v41 = vld [vmem:[#allocation2 + $0x50] sm:$0xff]
    %v42 = vld [vmem:[#allocation2 + $0x58] sm:$0xff]
    %v43 = vld [vmem:[#allocation2 + $0x60] sm:$0xff]
    %v44 = vld [vmem:[#allocation2 + $0x68] sm:$0xff]
    %v45 = vld [vmem:[#allocation2 + $0x70] sm:$0xff]
    %v46 = vld [vmem:[#allocation2 + $0x78] sm:$0xff]
    %v47 = vld [vmem:[%s1] sm:$0xff]
    %v48 = vld [vmem:[%s1 + $0x8] sm:$0xff]
    %v49 = vld [vmem:[%s2] sm:$0xff]
    %v50 = vld [vmem:[%s2 + $0x8] sm:$0xff]
    %v53 = vcombine.high %v47, %v47
    %v55 = vunpack.c.l.s4 1966171168
    %v56 = vunpack.c.0.s8 %v55
    %v57 = vlaneseq
    %v58 = vshrl.u32 %v57, 7
    %v59 = vsub.s32 %v56, %v58
    %v60 = vrot.slane %v47, %v59
    %v62 = vunpack.c.l.s4 1966171168
    %v63 = vunpack.c.0.s8 %v62
    %v64 = vlaneseq
    %v65 = vshrl.u32 %v64, 7
    %v66 = vsub.s32 %v63, %v65
    %v67 = vrot.slane %v53, %v66
    %v68 = vcombine.high %v60, %v60
    %v69 = vcombine.high %v67, %v67
    %v71 = vunpack.c.l.s4 1966171168
    %v72 = vunpack.c.0.s8 %v71
    %v73 = vlaneseq
    %v74 = vshrl.u32 %v73, 7
    %v75 = vsub.s32 %v72, %v74
    %v76 = vrot.slane %v60, %v75
    %v78 = vunpack.c.l.s4 1966171168
    %v79 = vunpack.c.0.s8 %v78
    %v80 = vlaneseq
    %v81 = vshrl.u32 %v80, 7
    %v82 = vsub.s32 %v79, %v81
    %v83 = vrot.slane %v67, %v82
    %v85 = vunpack.c.l.s4 1966171168
    %v86 = vunpack.c.0.s8 %v85
    %v87 = vlaneseq
    %v88 = vshrl.u32 %v87, 7
    %v89 = vsub.s32 %v86, %v88
    %v90 = vrot.slane %v68, %v89
    %v92 = vunpack.c.l.s4 1966171168
    %v93 = vunpack.c.0.s8 %v92
    %v94 = vlaneseq
    %v95 = vshrl.u32 %v94, 7
    %v96 = vsub.s32 %v93, %v95
    %v97 = vrot.slane %v69, %v96
    %v98 = vcombine.high %v76, %v76
    %v99 = vcombine.high %v83, %v83
    %v100 = vcombine.high %v90, %v90
    %v101 = vcombine.high %v97, %v97
    %v102 = vcombine.high %v48, %v48
    %v104 = vunpack.c.l.s4 1966171168
    %v105 = vunpack.c.0.s8 %v104
    %v106 = vlaneseq
    %v107 = vshrl.u32 %v106, 7
    %v108 = vsub.s32 %v105, %v107
    %v109 = vrot.slane %v48, %v108
    %v111 = vunpack.c.l.s4 1966171168
    %v112 = vunpack.c.0.s8 %v111
    %v113 = vlaneseq
    %v114 = vshrl.u32 %v113, 7
    %v115 = vsub.s32 %v112, %v114
    %v116 = vrot.slane %v102, %v115
    %v117 = vcombine.high %v109, %v109
    %v118 = vcombine.high %v116, %v116
    %v120 = vunpack.c.l.s4 1966171168
    %v121 = vunpack.c.0.s8 %v120
    %v122 = vlaneseq
    %v123 = vshrl.u32 %v122, 7
    %v124 = vsub.s32 %v121, %v123
    %v125 = vrot.slane %v109, %v124
    %v127 = vunpack.c.l.s4 1966171168
    %v128 = vunpack.c.0.s8 %v127
    %v129 = vlaneseq
    %v130 = vshrl.u32 %v129, 7
    %v131 = vsub.s32 %v128, %v130
    %v132 = vrot.slane %v116, %v131
    %v134 = vunpack.c.l.s4 1966171168
    %v135 = vunpack.c.0.s8 %v134
    %v136 = vlaneseq
    %v137 = vshrl.u32 %v136, 7
    %v138 = vsub.s32 %v135, %v137
    %v139 = vrot.slane %v117, %v138
    %v141 = vunpack.c.l.s4 1966171168
    %v142 = vunpack.c.0.s8 %v141
    %v143 = vlaneseq
    %v144 = vshrl.u32 %v143, 7
    %v145 = vsub.s32 %v142, %v144
    %v146 = vrot.slane %v118, %v145
    %v147 = vcombine.high %v125, %v125
    %v148 = vcombine.high %v132, %v132
    %v149 = vcombine.high %v139, %v139
    %v150 = vcombine.high %v146, %v146
    %v151 = vlaneseq
    %v152 = vshrl.u32 %v151, 7
    %v153 = vsub.s32 0, %v152
    %v154 = vrot.slane %v76, %v153
    %v155 = vlaneseq
    %v156 = vshrl.u32 %v155, 7
    %v157 = vsub.s32 0, %v156
    %v158 = vrot.slane %v90, %v157
    %v159 = vlaneseq
    %v160 = vshrl.u32 %v159, 7
    %v161 = vsub.s32 0, %v160
    %v162 = vrot.slane %v98, %v161
    %v163 = vlaneseq
    %v164 = vshrl.u32 %v163, 7
    %v165 = vsub.s32 0, %v164
    %v166 = vrot.slane %v100, %v165
    %v167 = vlaneseq
    %v168 = vshrl.u32 %v167, 7
    %v169 = vsub.s32 0, %v168
    %v170 = vrot.slane %v83, %v169
    %v171 = vlaneseq
    %v172 = vshrl.u32 %v171, 7
    %v173 = vsub.s32 0, %v172
    %v174 = vrot.slane %v97, %v173
    %v175 = vlaneseq
    %v176 = vshrl.u32 %v175, 7
    %v177 = vsub.s32 0, %v176
    %v178 = vrot.slane %v99, %v177
    %v179 = vlaneseq
    %v180 = vshrl.u32 %v179, 7
    %v181 = vsub.s32 0, %v180
    %v182 = vrot.slane %v101, %v181
    %v183 = vlaneseq
    %v184 = vshrl.u32 %v183, 7
    %v185 = vsub.s32 0, %v184
    %v186 = vrot.slane %v125, %v185
    %v187 = vlaneseq
    %v188 = vshrl.u32 %v187, 7
    %v189 = vsub.s32 0, %v188
    %v190 = vrot.slane %v139, %v189
    %v191 = vlaneseq
    %v192 = vshrl.u32 %v191, 7
    %v193 = vsub.s32 0, %v192
    %v194 = vrot.slane %v147, %v193
    %v195 = vlaneseq
    %v196 = vshrl.u32 %v195, 7
    %v197 = vsub.s32 0, %v196
    %v198 = vrot.slane %v149, %v197
    %v199 = vlaneseq
    %v200 = vshrl.u32 %v199, 7
    %v201 = vsub.s32 0, %v200
    %v202 = vrot.slane %v132, %v201
    %v203 = vlaneseq
    %v204 = vshrl.u32 %v203, 7
    %v205 = vsub.s32 0, %v204
    %v206 = vrot.slane %v146, %v205
    %v207 = vlaneseq
    %v208 = vshrl.u32 %v207, 7
    %v209 = vsub.s32 0, %v208
    %v210 = vrot.slane %v148, %v209
    %v211 = vlaneseq
    %v212 = vshrl.u32 %v211, 7
    %v213 = vsub.s32 0, %v212
    %v214 = vrot.slane %v150, %v213
    %v231 = vmul.f32 %v31, %v154
    %v232 = vmul.f32 %v32, %v158
    %v233 = vmul.f32 %v33, %v162
    %v234 = vmul.f32 %v34, %v166
    %v235 = vmul.f32 %v35, %v170
    %v236 = vmul.f32 %v36, %v174
    %v237 = vmul.f32 %v37, %v178
    %v238 = vmul.f32 %v38, %v182
    %v239 = vmul.f32 %v39, %v186
    %v240 = vmul.f32 %v40, %v190
    %v241 = vmul.f32 %v41, %v194
    %v242 = vmul.f32 %v42, %v198
    %v243 = vmul.f32 %v43, %v202
    %v244 = vmul.f32 %v44, %v206
    %v245 = vmul.f32 %v45, %v210
    %v246 = vmul.f32 %v46, %v214
    %vm247 = vcmask 261120
    %v248 = vsel %vm247, %v231, 0.0
    %249 = vadd.xlane.f32.xlu0 %v248
    %v250 = vpop.xlane.xlu0 %249
    %v251 = vsel %vm247, %v232, 0.0
    %252 = vadd.xlane.f32.xlu0 %v251
    %v253 = vpop.xlane.xlu0 %252
    %v254 = vsel %vm247, %v233, 0.0
    %255 = vadd.xlane.f32.xlu0 %v254
    %v256 = vpop.xlane.xlu0 %255
    %v257 = vsel %vm247, %v234, 0.0
    %258 = vadd.xlane.f32.xlu0 %v257
    %v259 = vpop.xlane.xlu0 %258
    %v260 = vsel %vm247, %v235, 0.0
    %261 = vadd.xlane.f32.xlu0 %v260
    %v262 = vpop.xlane.xlu0 %261
    %v263 = vsel %vm247, %v236, 0.0
    %264 = vadd.xlane.f32.xlu0 %v263
    %v265 = vpop.xlane.xlu0 %264
    %v266 = vsel %vm247, %v237, 0.0
    %267 = vadd.xlane.f32.xlu0 %v266
    %v268 = vpop.xlane.xlu0 %267
    %v269 = vsel %vm247, %v238, 0.0
    %270 = vadd.xlane.f32.xlu0 %v269
    %v271 = vpop.xlane.xlu0 %270
    %v272 = vsel %vm247, %v239, 0.0
    %273 = vadd.xlane.f32.xlu0 %v272
    %v274 = vpop.xlane.xlu0 %273
    %v275 = vsel %vm247, %v240, 0.0
    %276 = vadd.xlane.f32.xlu0 %v275
    %v277 = vpop.xlane.xlu0 %276
    %v278 = vsel %vm247, %v241, 0.0
    %279 = vadd.xlane.f32.xlu0 %v278
    %v280 = vpop.xlane.xlu0 %279
    %v281 = vsel %vm247, %v242, 0.0
    %282 = vadd.xlane.f32.xlu0 %v281
    %v283 = vpop.xlane.xlu0 %282
    %v284 = vsel %vm247, %v243, 0.0
    %285 = vadd.xlane.f32.xlu0 %v284
    %v286 = vpop.xlane.xlu0 %285
    %v287 = vsel %vm247, %v244, 0.0
    %288 = vadd.xlane.f32.xlu0 %v287
    %v289 = vpop.xlane.xlu0 %288
    %v290 = vsel %vm247, %v245, 0.0
    %291 = vadd.xlane.f32.xlu0 %v290
    %v292 = vpop.xlane.xlu0 %291
    %v293 = vsel %vm247, %v246, 0.0
    %294 = vadd.xlane.f32.xlu0 %v293
    %v295 = vpop.xlane.xlu0 %294
    %v298 = vlaneseq
    %v299 = vshrl.u32 %v298, 7
    %v300 = vsub.s32 0, %v299
    %v301 = vrot.slane %v49, %v300
    %303 = vbcast.lane.b32.xlu0 %v301, 256
    %v304 = vpop.permute.xlu0 %303
    %v305 = vlaneseq
    %v306 = vshrl.u32 %v305, 7
    %v307 = vsub.s32 1, %v306
    %v308 = vrot.slane %v49, %v307
    %310 = vbcast.lane.b32.xlu0 %v308, 256
    %v311 = vpop.permute.xlu0 %310
    %v312 = vlaneseq
    %v313 = vshrl.u32 %v312, 7
    %v314 = vsub.s32 2, %v313
    %v315 = vrot.slane %v49, %v314
    %317 = vbcast.lane.b32.xlu0 %v315, 256
    %v318 = vpop.permute.xlu0 %317
    %v319 = vlaneseq
    %v320 = vshrl.u32 %v319, 7
    %v321 = vsub.s32 3, %v320
    %v322 = vrot.slane %v49, %v321
    %324 = vbcast.lane.b32.xlu0 %v322, 256
    %v325 = vpop.permute.xlu0 %324
    %v326 = vlaneseq
    %v327 = vshrl.u32 %v326, 7
    %v328 = vsub.s32 4, %v327
    %v329 = vrot.slane %v49, %v328
    %331 = vbcast.lane.b32.xlu0 %v329, 256
    %v332 = vpop.permute.xlu0 %331
    %v333 = vlaneseq
    %v334 = vshrl.u32 %v333, 7
    %v335 = vsub.s32 5, %v334
    %v336 = vrot.slane %v49, %v335
    %338 = vbcast.lane.b32.xlu0 %v336, 256
    %v339 = vpop.permute.xlu0 %338
    %v340 = vlaneseq
    %v341 = vshrl.u32 %v340, 7
    %v342 = vsub.s32 6, %v341
    %v343 = vrot.slane %v49, %v342
    %345 = vbcast.lane.b32.xlu0 %v343, 256
    %v346 = vpop.permute.xlu0 %345
    %v347 = vlaneseq
    %v348 = vshrl.u32 %v347, 7
    %v349 = vsub.s32 7, %v348
    %v350 = vrot.slane %v49, %v349
    %352 = vbcast.lane.b32.xlu0 %v350, 256
    %v353 = vpop.permute.xlu0 %352
    %v354 = vlaneseq
    %v355 = vshrl.u32 %v354, 7
    %v356 = vsub.s32 0, %v355
    %v357 = vrot.slane %v50, %v356
    %359 = vbcast.lane.b32.xlu0 %v357, 256
    %v360 = vpop.permute.xlu0 %359
    %v361 = vlaneseq
    %v362 = vshrl.u32 %v361, 7
    %v363 = vsub.s32 1, %v362
    %v364 = vrot.slane %v50, %v363
    %366 = vbcast.lane.b32.xlu0 %v364, 256
    %v367 = vpop.permute.xlu0 %366
    %v368 = vlaneseq
    %v369 = vshrl.u32 %v368, 7
    %v370 = vsub.s32 2, %v369
    %v371 = vrot.slane %v50, %v370
    %373 = vbcast.lane.b32.xlu0 %v371, 256
    %v374 = vpop.permute.xlu0 %373
    %v375 = vlaneseq
    %v376 = vshrl.u32 %v375, 7
    %v377 = vsub.s32 3, %v376
    %v378 = vrot.slane %v50, %v377
    %380 = vbcast.lane.b32.xlu0 %v378, 256
    %v381 = vpop.permute.xlu0 %380
    %v382 = vlaneseq
    %v383 = vshrl.u32 %v382, 7
    %v384 = vsub.s32 4, %v383
    %v385 = vrot.slane %v50, %v384
    %387 = vbcast.lane.b32.xlu0 %v385, 256
    %v388 = vpop.permute.xlu0 %387
    %v389 = vlaneseq
    %v390 = vshrl.u32 %v389, 7
    %v391 = vsub.s32 5, %v390
    %v392 = vrot.slane %v50, %v391
    %394 = vbcast.lane.b32.xlu0 %v392, 256
    %v395 = vpop.permute.xlu0 %394
    %v396 = vlaneseq
    %v397 = vshrl.u32 %v396, 7
    %v398 = vsub.s32 6, %v397
    %v399 = vrot.slane %v50, %v398
    %401 = vbcast.lane.b32.xlu0 %v399, 256
    %v402 = vpop.permute.xlu0 %401
    %v403 = vlaneseq
    %v404 = vshrl.u32 %v403, 7
    %v405 = vsub.s32 7, %v404
    %v406 = vrot.slane %v50, %v405
    %408 = vbcast.lane.b32.xlu0 %v406, 256
    %v409 = vpop.permute.xlu0 %408
    %v426 = vmul.f32 %v250, %v304
    %v427 = vmul.f32 %v253, %v311
    %v428 = vmul.f32 %v256, %v318
    %v429 = vmul.f32 %v259, %v325
    %v430 = vmul.f32 %v262, %v332
    %v431 = vmul.f32 %v265, %v339
    %v432 = vmul.f32 %v268, %v346
    %v433 = vmul.f32 %v271, %v353
    %v434 = vmul.f32 %v274, %v360
    %v435 = vmul.f32 %v277, %v367
    %v436 = vmul.f32 %v280, %v374
    %v437 = vmul.f32 %v283, %v381
    %v438 = vmul.f32 %v286, %v388
    %v439 = vmul.f32 %v289, %v395
    %v440 = vmul.f32 %v292, %v402
    %v441 = vmul.f32 %v295, %v409
    %458 = vset.pattern.permute.xlu0 0
    %459 = vperm.xlu0 %458, %v426
    %v460 = vpop.permute.xlu0 %459
    %461 = vset.pattern.permute.xlu0 0
    %462 = vperm.xlu0 %461, %v427
    %v463 = vpop.permute.xlu0 %462
    %464 = vset.pattern.permute.xlu0 0
    %465 = vperm.xlu0 %464, %v428
    %v466 = vpop.permute.xlu0 %465
    %467 = vset.pattern.permute.xlu0 0
    %468 = vperm.xlu0 %467, %v429
    %v469 = vpop.permute.xlu0 %468
    %470 = vset.pattern.permute.xlu0 0
    %471 = vperm.xlu0 %470, %v430
    %v472 = vpop.permute.xlu0 %471
    %473 = vset.pattern.permute.xlu0 0
    %474 = vperm.xlu0 %473, %v431
    %v475 = vpop.permute.xlu0 %474
    %476 = vset.pattern.permute.xlu0 0
    %477 = vperm.xlu0 %476, %v432
    %v478 = vpop.permute.xlu0 %477
    %479 = vset.pattern.permute.xlu0 0
    %480 = vperm.xlu0 %479, %v433
    %v481 = vpop.permute.xlu0 %480
    %482 = vset.pattern.permute.xlu0 0
    %483 = vperm.xlu0 %482, %v434
    %v484 = vpop.permute.xlu0 %483
    %485 = vset.pattern.permute.xlu0 0
    %486 = vperm.xlu0 %485, %v435
    %v487 = vpop.permute.xlu0 %486
    %488 = vset.pattern.permute.xlu0 0
    %489 = vperm.xlu0 %488, %v436
    %v490 = vpop.permute.xlu0 %489
    %491 = vset.pattern.permute.xlu0 0
    %492 = vperm.xlu0 %491, %v437
    %v493 = vpop.permute.xlu0 %492
    %494 = vset.pattern.permute.xlu0 0
    %495 = vperm.xlu0 %494, %v438
    %v496 = vpop.permute.xlu0 %495
    %497 = vset.pattern.permute.xlu0 0
    %498 = vperm.xlu0 %497, %v439
    %v499 = vpop.permute.xlu0 %498
    %500 = vset.pattern.permute.xlu0 0
    %501 = vperm.xlu0 %500, %v440
    %v502 = vpop.permute.xlu0 %501
    %503 = vset.pattern.permute.xlu0 0
    %504 = vperm.xlu0 %503, %v441
    %v505 = vpop.permute.xlu0 %504
    %v506 = vlaneseq
    %v507 = vand.u32 %v506, 127
    %v508 = vlaneseq
    %v509 = vshrl.u32 %v508, 7
    %v510 = vsub.s32 %v507, %v509
    %v511 = vrot.slane %v460, %v510
    %v512 = vlaneseq
    %v513 = vshrl.u32 %v512, 7
    %v514 = vsub.s32 %v507, %v513
    %v515 = vrot.slane %v463, %v514
    %v516 = vlaneseq
    %v517 = vshrl.u32 %v516, 7
    %v518 = vsub.s32 %v507, %v517
    %v519 = vrot.slane %v466, %v518
    %v520 = vlaneseq
    %v521 = vshrl.u32 %v520, 7
    %v522 = vsub.s32 %v507, %v521
    %v523 = vrot.slane %v469, %v522
    %v524 = vlaneseq
    %v525 = vshrl.u32 %v524, 7
    %v526 = vsub.s32 %v507, %v525
    %v527 = vrot.slane %v472, %v526
    %v528 = vlaneseq
    %v529 = vshrl.u32 %v528, 7
    %v530 = vsub.s32 %v507, %v529
    %v531 = vrot.slane %v475, %v530
    %v532 = vlaneseq
    %v533 = vshrl.u32 %v532, 7
    %v534 = vsub.s32 %v507, %v533
    %v535 = vrot.slane %v478, %v534
    %v536 = vlaneseq
    %v537 = vshrl.u32 %v536, 7
    %v538 = vsub.s32 %v507, %v537
    %v539 = vrot.slane %v481, %v538
    %v540 = vlaneseq
    %v541 = vshrl.u32 %v540, 7
    %v542 = vsub.s32 %v507, %v541
    %v543 = vrot.slane %v484, %v542
    %v544 = vlaneseq
    %v545 = vshrl.u32 %v544, 7
    %v546 = vsub.s32 %v507, %v545
    %v547 = vrot.slane %v487, %v546
    %v548 = vlaneseq
    %v549 = vshrl.u32 %v548, 7
    %v550 = vsub.s32 %v507, %v549
    %v551 = vrot.slane %v490, %v550
    %v552 = vlaneseq
    %v553 = vshrl.u32 %v552, 7
    %v554 = vsub.s32 %v507, %v553
    %v555 = vrot.slane %v493, %v554
    %v556 = vlaneseq
    %v557 = vshrl.u32 %v556, 7
    %v558 = vsub.s32 %v507, %v557
    %v559 = vrot.slane %v496, %v558
    %v560 = vlaneseq
    %v561 = vshrl.u32 %v560, 7
    %v562 = vsub.s32 %v507, %v561
    %v563 = vrot.slane %v499, %v562
    %v564 = vlaneseq
    %v565 = vshrl.u32 %v564, 7
    %v566 = vsub.s32 %v507, %v565
    %v567 = vrot.slane %v502, %v566
    %v568 = vlaneseq
    %v569 = vshrl.u32 %v568, 7
    %v570 = vsub.s32 %v507, %v569
    %v571 = vrot.slane %v505, %v570
    %vm572 = vcmask 1041409
    %v573 = vsel %vm572, %v515, %v511
    %vm574 = vcmask 1042434
    %v575 = vsel %vm574, %v519, %v573
    %vm576 = vcmask 1043459
    %v577 = vsel %vm576, %v523, %v575
    %vm578 = vcmask 1044484
    %v579 = vsel %vm578, %v527, %v577
    %vm580 = vcmask 1045509
    %v581 = vsel %vm580, %v531, %v579
    %vm582 = vcmask 1046534
    %v583 = vsel %vm582, %v535, %v581
    %vm584 = vcmask 1047559
    %v585 = vsel %vm584, %v539, %v583
    %v586 = vsel %vm572, %v547, %v543
    %v587 = vsel %vm574, %v551, %v586
    %v588 = vsel %vm576, %v555, %v587
    %v589 = vsel %vm578, %v559, %v588
    %v590 = vsel %vm580, %v563, %v589
    %v591 = vsel %vm582, %v567, %v590
    %v592 = vsel %vm584, %v571, %v591
    %vm595 = vcmask 64512
    %v596 = vsel %vm595, %v585, -inf
    %597 = vmax.xlane.f32.xlu0 %v596
    %v598 = vpop.xlane.xlu0 %597
    %v599 = vsel %vm595, %v592, -inf
    %600 = vmax.xlane.f32.xlu0 %v599
    %v601 = vpop.xlane.xlu0 %600
    %v604 = vlaneseq
    %v605 = vshrl.u32 %v604, 7
    %v606 = vsub.s32 0, %v605
    %v607 = vrot.slane %v598, %v606
    %v608 = vlaneseq
    %v609 = vshrl.u32 %v608, 7
    %v610 = vsub.s32 1, %v609
    %v611 = vrot.slane %v598, %v610
    %v612 = vlaneseq
    %v613 = vshrl.u32 %v612, 7
    %v614 = vsub.s32 2, %v613
    %v615 = vrot.slane %v598, %v614
    %v616 = vlaneseq
    %v617 = vshrl.u32 %v616, 7
    %v618 = vsub.s32 3, %v617
    %v619 = vrot.slane %v598, %v618
    %v620 = vlaneseq
    %v621 = vshrl.u32 %v620, 7
    %v622 = vsub.s32 4, %v621
    %v623 = vrot.slane %v598, %v622
    %v624 = vlaneseq
    %v625 = vshrl.u32 %v624, 7
    %v626 = vsub.s32 5, %v625
    %v627 = vrot.slane %v598, %v626
    %v628 = vlaneseq
    %v629 = vshrl.u32 %v628, 7
    %v630 = vsub.s32 6, %v629
    %v631 = vrot.slane %v598, %v630
    %v632 = vlaneseq
    %v633 = vshrl.u32 %v632, 7
    %v634 = vsub.s32 7, %v633
    %v635 = vrot.slane %v598, %v634
    %v636 = vlaneseq
    %v637 = vshrl.u32 %v636, 7
    %v638 = vsub.s32 0, %v637
    %v639 = vrot.slane %v601, %v638
    %v640 = vlaneseq
    %v641 = vshrl.u32 %v640, 7
    %v642 = vsub.s32 1, %v641
    %v643 = vrot.slane %v601, %v642
    %v644 = vlaneseq
    %v645 = vshrl.u32 %v644, 7
    %v646 = vsub.s32 2, %v645
    %v647 = vrot.slane %v601, %v646
    %v648 = vlaneseq
    %v649 = vshrl.u32 %v648, 7
    %v650 = vsub.s32 3, %v649
    %v651 = vrot.slane %v601, %v650
    %v652 = vlaneseq
    %v653 = vshrl.u32 %v652, 7
    %v654 = vsub.s32 4, %v653
    %v655 = vrot.slane %v601, %v654
    %v656 = vlaneseq
    %v657 = vshrl.u32 %v656, 7
    %v658 = vsub.s32 5, %v657
    %v659 = vrot.slane %v601, %v658
    %v660 = vlaneseq
    %v661 = vshrl.u32 %v660, 7
    %v662 = vsub.s32 6, %v661
    %v663 = vrot.slane %v601, %v662
    %v664 = vlaneseq
    %v665 = vshrl.u32 %v664, 7
    %v666 = vsub.s32 7, %v665
    %v667 = vrot.slane %v601, %v666
    %v684 = vsub.f32 %v426, %v607
    %v685 = vsub.f32 %v427, %v611
    %v686 = vsub.f32 %v428, %v615
    %v687 = vsub.f32 %v429, %v619
    %v688 = vsub.f32 %v430, %v623
    %v689 = vsub.f32 %v431, %v627
    %v690 = vsub.f32 %v432, %v631
    %v691 = vsub.f32 %v433, %v635
    %v692 = vsub.f32 %v434, %v639
    %v693 = vsub.f32 %v435, %v643
    %v694 = vsub.f32 %v436, %v647
    %v695 = vsub.f32 %v437, %v651
    %v696 = vsub.f32 %v438, %v655
    %v697 = vsub.f32 %v439, %v659
    %v698 = vsub.f32 %v440, %v663
    %v699 = vsub.f32 %v441, %v667
    %v700 = vmul.f32 %v684, 1.442695
    %v701 = vpow.pop %v700
    %v702 = vmul.f32 %v685, 1.442695
    %v703 = vpow.pop %v702
    %v704 = vmul.f32 %v686, 1.442695
    %v705 = vpow.pop %v704
    %v706 = vmul.f32 %v687, 1.442695
    %v707 = vpow.pop %v706
    %v708 = vmul.f32 %v688, 1.442695
    %v709 = vpow.pop %v708
    %v710 = vmul.f32 %v689, 1.442695
    %v711 = vpow.pop %v710
    %v712 = vmul.f32 %v690, 1.442695
    %v713 = vpow.pop %v712
    %v714 = vmul.f32 %v691, 1.442695
    %v715 = vpow.pop %v714
    %v716 = vmul.f32 %v692, 1.442695
    %v717 = vpow.pop %v716
    %v718 = vmul.f32 %v693, 1.442695
    %v719 = vpow.pop %v718
    %v720 = vmul.f32 %v694, 1.442695
    %v721 = vpow.pop %v720
    %v722 = vmul.f32 %v695, 1.442695
    %v723 = vpow.pop %v722
    %v724 = vmul.f32 %v696, 1.442695
    %v725 = vpow.pop %v724
    %v726 = vmul.f32 %v697, 1.442695
    %v727 = vpow.pop %v726
    %v728 = vmul.f32 %v698, 1.442695
    %v729 = vpow.pop %v728
    %v730 = vmul.f32 %v699, 1.442695
    %v731 = vpow.pop %v730
    %748 = vset.pattern.permute.xlu0 0
    %749 = vperm.xlu0 %748, %v701
    %v750 = vpop.permute.xlu0 %749
    %751 = vset.pattern.permute.xlu0 0
    %752 = vperm.xlu0 %751, %v703
    %v753 = vpop.permute.xlu0 %752
    %754 = vset.pattern.permute.xlu0 0
    %755 = vperm.xlu0 %754, %v705
    %v756 = vpop.permute.xlu0 %755
    %757 = vset.pattern.permute.xlu0 0
    %758 = vperm.xlu0 %757, %v707
    %v759 = vpop.permute.xlu0 %758
    %760 = vset.pattern.permute.xlu0 0
    %761 = vperm.xlu0 %760, %v709
    %v762 = vpop.permute.xlu0 %761
    %763 = vset.pattern.permute.xlu0 0
    %764 = vperm.xlu0 %763, %v711
    %v765 = vpop.permute.xlu0 %764
    %766 = vset.pattern.permute.xlu0 0
    %767 = vperm.xlu0 %766, %v713
    %v768 = vpop.permute.xlu0 %767
    %769 = vset.pattern.permute.xlu0 0
    %770 = vperm.xlu0 %769, %v715
    %v771 = vpop.permute.xlu0 %770
    %772 = vset.pattern.permute.xlu0 0
    %773 = vperm.xlu0 %772, %v717
    %v774 = vpop.permute.xlu0 %773
    %775 = vset.pattern.permute.xlu0 0
    %776 = vperm.xlu0 %775, %v719
    %v777 = vpop.permute.xlu0 %776
    %778 = vset.pattern.permute.xlu0 0
    %779 = vperm.xlu0 %778, %v721
    %v780 = vpop.permute.xlu0 %779
    %781 = vset.pattern.permute.xlu0 0
    %782 = vperm.xlu0 %781, %v723
    %v783 = vpop.permute.xlu0 %782
    %784 = vset.pattern.permute.xlu0 0
    %785 = vperm.xlu0 %784, %v725
    %v786 = vpop.permute.xlu0 %785
    %787 = vset.pattern.permute.xlu0 0
    %788 = vperm.xlu0 %787, %v727
    %v789 = vpop.permute.xlu0 %788
    %790 = vset.pattern.permute.xlu0 0
    %791 = vperm.xlu0 %790, %v729
    %v792 = vpop.permute.xlu0 %791
    %793 = vset.pattern.permute.xlu0 0
    %794 = vperm.xlu0 %793, %v731
    %v795 = vpop.permute.xlu0 %794
    %v796 = vlaneseq
    %v797 = vshrl.u32 %v796, 7
    %v798 = vsub.s32 %v507, %v797
    %v799 = vrot.slane %v750, %v798
    %v800 = vlaneseq
    %v801 = vshrl.u32 %v800, 7
    %v802 = vsub.s32 %v507, %v801
    %v803 = vrot.slane %v753, %v802
    %v804 = vlaneseq
    %v805 = vshrl.u32 %v804, 7
    %v806 = vsub.s32 %v507, %v805
    %v807 = vrot.slane %v756, %v806
    %v808 = vlaneseq
    %v809 = vshrl.u32 %v808, 7
    %v810 = vsub.s32 %v507, %v809
    %v811 = vrot.slane %v759, %v810
    %v812 = vlaneseq
    %v813 = vshrl.u32 %v812, 7
    %v814 = vsub.s32 %v507, %v813
    %v815 = vrot.slane %v762, %v814
    %v816 = vlaneseq
    %v817 = vshrl.u32 %v816, 7
    %v818 = vsub.s32 %v507, %v817
    %v819 = vrot.slane %v765, %v818
    %v820 = vlaneseq
    %v821 = vshrl.u32 %v820, 7
    %v822 = vsub.s32 %v507, %v821
    %v823 = vrot.slane %v768, %v822
    %v824 = vlaneseq
    %v825 = vshrl.u32 %v824, 7
    %v826 = vsub.s32 %v507, %v825
    %v827 = vrot.slane %v771, %v826
    %v828 = vlaneseq
    %v829 = vshrl.u32 %v828, 7
    %v830 = vsub.s32 %v507, %v829
    %v831 = vrot.slane %v774, %v830
    %v832 = vlaneseq
    %v833 = vshrl.u32 %v832, 7
    %v834 = vsub.s32 %v507, %v833
    %v835 = vrot.slane %v777, %v834
    %v836 = vlaneseq
    %v837 = vshrl.u32 %v836, 7
    %v838 = vsub.s32 %v507, %v837
    %v839 = vrot.slane %v780, %v838
    %v840 = vlaneseq
    %v841 = vshrl.u32 %v840, 7
    %v842 = vsub.s32 %v507, %v841
    %v843 = vrot.slane %v783, %v842
    %v844 = vlaneseq
    %v845 = vshrl.u32 %v844, 7
    %v846 = vsub.s32 %v507, %v845
    %v847 = vrot.slane %v786, %v846
    %v848 = vlaneseq
    %v849 = vshrl.u32 %v848, 7
    %v850 = vsub.s32 %v507, %v849
    %v851 = vrot.slane %v789, %v850
    %v852 = vlaneseq
    %v853 = vshrl.u32 %v852, 7
    %v854 = vsub.s32 %v507, %v853
    %v855 = vrot.slane %v792, %v854
    %v856 = vlaneseq
    %v857 = vshrl.u32 %v856, 7
    %v858 = vsub.s32 %v507, %v857
    %v859 = vrot.slane %v795, %v858
    %v860 = vsel %vm572, %v803, %v799
    %v861 = vsel %vm574, %v807, %v860
    %v862 = vsel %vm576, %v811, %v861
    %v863 = vsel %vm578, %v815, %v862
    %v864 = vsel %vm580, %v819, %v863
    %v865 = vsel %vm582, %v823, %v864
    %v866 = vsel %vm584, %v827, %v865
    %v867 = vsel %vm572, %v835, %v831
    %v868 = vsel %vm574, %v839, %v867
    %v869 = vsel %vm576, %v843, %v868
    %v870 = vsel %vm578, %v847, %v869
    %v871 = vsel %vm580, %v851, %v870
    %v872 = vsel %vm582, %v855, %v871
    %v873 = vsel %vm584, %v859, %v872
    %v876 = vsel %vm595, %v866, 0.0
    %877 = vadd.xlane.f32.xlu0 %v876
    %v878 = vpop.xlane.xlu0 %877
    %v879 = vsel %vm595, %v873, 0.0
    %880 = vadd.xlane.f32.xlu0 %v879
    %v881 = vpop.xlane.xlu0 %880
    %v882 = vmul.f32 %v701, %v304
    %v883 = vmul.f32 %v703, %v311
    %v884 = vmul.f32 %v705, %v318
    %v885 = vmul.f32 %v707, %v325
    %v886 = vmul.f32 %v709, %v332
    %v887 = vmul.f32 %v711, %v339
    %v888 = vmul.f32 %v713, %v346
    %v889 = vmul.f32 %v715, %v353
    %v890 = vmul.f32 %v717, %v360
    %v891 = vmul.f32 %v719, %v367
    %v892 = vmul.f32 %v721, %v374
    %v893 = vmul.f32 %v723, %v381
    %v894 = vmul.f32 %v725, %v388
    %v895 = vmul.f32 %v727, %v395
    %v896 = vmul.f32 %v729, %v402
    %v897 = vmul.f32 %v731, %v409
    %914 = vset.pattern.permute.xlu0 0
    %915 = vperm.xlu0 %914, %v882
    %v916 = vpop.permute.xlu0 %915
    %917 = vset.pattern.permute.xlu0 0
    %918 = vperm.xlu0 %917, %v883
    %v919 = vpop.permute.xlu0 %918
    %920 = vset.pattern.permute.xlu0 0
    %921 = vperm.xlu0 %920, %v884
    %v922 = vpop.permute.xlu0 %921
    %923 = vset.pattern.permute.xlu0 0
    %924 = vperm.xlu0 %923, %v885
    %v925 = vpop.permute.xlu0 %924
    %926 = vset.pattern.permute.xlu0 0
    %927 = vperm.xlu0 %926, %v886
    %v928 = vpop.permute.xlu0 %927
    %929 = vset.pattern.permute.xlu0 0
    %930 = vperm.xlu0 %929, %v887
    %v931 = vpop.permute.xlu0 %930
    %932 = vset.pattern.permute.xlu0 0
    %933 = vperm.xlu0 %932, %v888
    %v934 = vpop.permute.xlu0 %933
    %935 = vset.pattern.permute.xlu0 0
    %936 = vperm.xlu0 %935, %v889
    %v937 = vpop.permute.xlu0 %936
    %938 = vset.pattern.permute.xlu0 0
    %939 = vperm.xlu0 %938, %v890
    %v940 = vpop.permute.xlu0 %939
    %941 = vset.pattern.permute.xlu0 0
    %942 = vperm.xlu0 %941, %v891
    %v943 = vpop.permute.xlu0 %942
    %944 = vset.pattern.permute.xlu0 0
    %945 = vperm.xlu0 %944, %v892
    %v946 = vpop.permute.xlu0 %945
    %947 = vset.pattern.permute.xlu0 0
    %948 = vperm.xlu0 %947, %v893
    %v949 = vpop.permute.xlu0 %948
    %950 = vset.pattern.permute.xlu0 0
    %951 = vperm.xlu0 %950, %v894
    %v952 = vpop.permute.xlu0 %951
    %953 = vset.pattern.permute.xlu0 0
    %954 = vperm.xlu0 %953, %v895
    %v955 = vpop.permute.xlu0 %954
    %956 = vset.pattern.permute.xlu0 0
    %957 = vperm.xlu0 %956, %v896
    %v958 = vpop.permute.xlu0 %957
    %959 = vset.pattern.permute.xlu0 0
    %960 = vperm.xlu0 %959, %v897
    %v961 = vpop.permute.xlu0 %960
    %v962 = vlaneseq
    %v963 = vshrl.u32 %v962, 7
    %v964 = vsub.s32 %v507, %v963
    %v965 = vrot.slane %v916, %v964
    %v966 = vlaneseq
    %v967 = vshrl.u32 %v966, 7
    %v968 = vsub.s32 %v507, %v967
    %v969 = vrot.slane %v919, %v968
    %v970 = vlaneseq
    %v971 = vshrl.u32 %v970, 7
    %v972 = vsub.s32 %v507, %v971
    %v973 = vrot.slane %v922, %v972
    %v974 = vlaneseq
    %v975 = vshrl.u32 %v974, 7
    %v976 = vsub.s32 %v507, %v975
    %v977 = vrot.slane %v925, %v976
    %v978 = vlaneseq
    %v979 = vshrl.u32 %v978, 7
    %v980 = vsub.s32 %v507, %v979
    %v981 = vrot.slane %v928, %v980
    %v982 = vlaneseq
    %v983 = vshrl.u32 %v982, 7
    %v984 = vsub.s32 %v507, %v983
    %v985 = vrot.slane %v931, %v984
    %v986 = vlaneseq
    %v987 = vshrl.u32 %v986, 7
    %v988 = vsub.s32 %v507, %v987
    %v989 = vrot.slane %v934, %v988
    %v990 = vlaneseq
    %v991 = vshrl.u32 %v990, 7
    %v992 = vsub.s32 %v507, %v991
    %v993 = vrot.slane %v937, %v992
    %v994 = vlaneseq
    %v995 = vshrl.u32 %v994, 7
    %v996 = vsub.s32 %v507, %v995
    %v997 = vrot.slane %v940, %v996
    %v998 = vlaneseq
    %v999 = vshrl.u32 %v998, 7
    %v1000 = vsub.s32 %v507, %v999
    %v1001 = vrot.slane %v943, %v1000
    %v1002 = vlaneseq
    %v1003 = vshrl.u32 %v1002, 7
    %v1004 = vsub.s32 %v507, %v1003
    %v1005 = vrot.slane %v946, %v1004
    %v1006 = vlaneseq
    %v1007 = vshrl.u32 %v1006, 7
    %v1008 = vsub.s32 %v507, %v1007
    %v1009 = vrot.slane %v949, %v1008
    %v1010 = vlaneseq
    %v1011 = vshrl.u32 %v1010, 7
    %v1012 = vsub.s32 %v507, %v1011
    %v1013 = vrot.slane %v952, %v1012
    %v1014 = vlaneseq
    %v1015 = vshrl.u32 %v1014, 7
    %v1016 = vsub.s32 %v507, %v1015
    %v1017 = vrot.slane %v955, %v1016
    %v1018 = vlaneseq
    %v1019 = vshrl.u32 %v1018, 7
    %v1020 = vsub.s32 %v507, %v1019
    %v1021 = vrot.slane %v958, %v1020
    %v1022 = vlaneseq
    %v1023 = vshrl.u32 %v1022, 7
    %v1024 = vsub.s32 %v507, %v1023
    %v1025 = vrot.slane %v961, %v1024
    %v1026 = vsel %vm572, %v969, %v965
    %v1027 = vsel %vm574, %v973, %v1026
    %v1028 = vsel %vm576, %v977, %v1027
    %v1029 = vsel %vm578, %v981, %v1028
    %v1030 = vsel %vm580, %v985, %v1029
    %v1031 = vsel %vm582, %v989, %v1030
    %v1032 = vsel %vm584, %v993, %v1031
    %v1033 = vsel %vm572, %v1001, %v997
    %v1034 = vsel %vm574, %v1005, %v1033
    %v1035 = vsel %vm576, %v1009, %v1034
    %v1036 = vsel %vm578, %v1013, %v1035
    %v1037 = vsel %vm580, %v1017, %v1036
    %v1038 = vsel %vm582, %v1021, %v1037
    %v1039 = vsel %vm584, %v1025, %v1038
    %v1042 = vsel %vm595, %v1032, 0.0
    %1043 = vadd.xlane.f32.xlu0 %v1042
    %v1044 = vpop.xlane.xlu0 %1043
    %v1045 = vsel %vm595, %v1039, 0.0
    %1046 = vadd.xlane.f32.xlu0 %v1045
    %v1047 = vpop.xlane.xlu0 %1046
    %v1048 = vmul.f32 %v878, 1e-13
    %v1049 = vmul.f32 %v881, 1e-13
    %v1050 = vadd.f32 %v1044, %v1048
    %v1051 = vadd.f32 %v1047, %v1049
    %v1054 = vlaneseq
    %v1055 = vshrl.u32 %v1054, 7
    %v1056 = vsub.s32 0, %v1055
    %v1057 = vrot.slane %v1050, %v1056
    %v1058 = vlaneseq
    %v1059 = vshrl.u32 %v1058, 7
    %v1060 = vsub.s32 1, %v1059
    %v1061 = vrot.slane %v1050, %v1060
    %v1062 = vlaneseq
    %v1063 = vshrl.u32 %v1062, 7
    %v1064 = vsub.s32 2, %v1063
    %v1065 = vrot.slane %v1050, %v1064
    %v1066 = vlaneseq
    %v1067 = vshrl.u32 %v1066, 7
    %v1068 = vsub.s32 3, %v1067
    %v1069 = vrot.slane %v1050, %v1068
    %v1070 = vlaneseq
    %v1071 = vshrl.u32 %v1070, 7
    %v1072 = vsub.s32 4, %v1071
    %v1073 = vrot.slane %v1050, %v1072
    %v1074 = vlaneseq
    %v1075 = vshrl.u32 %v1074, 7
    %v1076 = vsub.s32 5, %v1075
    %v1077 = vrot.slane %v1050, %v1076
    %v1078 = vlaneseq
    %v1079 = vshrl.u32 %v1078, 7
    %v1080 = vsub.s32 6, %v1079
    %v1081 = vrot.slane %v1050, %v1080
    %v1082 = vlaneseq
    %v1083 = vshrl.u32 %v1082, 7
    %v1084 = vsub.s32 7, %v1083
    %v1085 = vrot.slane %v1050, %v1084
    %v1086 = vlaneseq
    %v1087 = vshrl.u32 %v1086, 7
    %v1088 = vsub.s32 0, %v1087
    %v1089 = vrot.slane %v1051, %v1088
    %v1090 = vlaneseq
    %v1091 = vshrl.u32 %v1090, 7
    %v1092 = vsub.s32 1, %v1091
    %v1093 = vrot.slane %v1051, %v1092
    %v1094 = vlaneseq
    %v1095 = vshrl.u32 %v1094, 7
    %v1096 = vsub.s32 2, %v1095
    %v1097 = vrot.slane %v1051, %v1096
    %v1098 = vlaneseq
    %v1099 = vshrl.u32 %v1098, 7
    %v1100 = vsub.s32 3, %v1099
    %v1101 = vrot.slane %v1051, %v1100
    %v1102 = vlaneseq
    %v1103 = vshrl.u32 %v1102, 7
    %v1104 = vsub.s32 4, %v1103
    %v1105 = vrot.slane %v1051, %v1104
    %v1106 = vlaneseq
    %v1107 = vshrl.u32 %v1106, 7
    %v1108 = vsub.s32 5, %v1107
    %v1109 = vrot.slane %v1051, %v1108
    %v1110 = vlaneseq
    %v1111 = vshrl.u32 %v1110, 7
    %v1112 = vsub.s32 6, %v1111
    %v1113 = vrot.slane %v1051, %v1112
    %v1114 = vlaneseq
    %v1115 = vshrl.u32 %v1114, 7
    %v1116 = vsub.s32 7, %v1115
    %v1117 = vrot.slane %v1051, %v1116
    %v1134 = vrcp.pop %v1057
    %v1135 = vmul.f32 %v882, %v1134
    %v1136 = vrcp.pop %v1061
    %v1137 = vmul.f32 %v883, %v1136
    %v1138 = vrcp.pop %v1065
    %v1139 = vmul.f32 %v884, %v1138
    %v1140 = vrcp.pop %v1069
    %v1141 = vmul.f32 %v885, %v1140
    %v1142 = vrcp.pop %v1073
    %v1143 = vmul.f32 %v886, %v1142
    %v1144 = vrcp.pop %v1077
    %v1145 = vmul.f32 %v887, %v1144
    %v1146 = vrcp.pop %v1081
    %v1147 = vmul.f32 %v888, %v1146
    %v1148 = vrcp.pop %v1085
    %v1149 = vmul.f32 %v889, %v1148
    %v1150 = vrcp.pop %v1089
    %v1151 = vmul.f32 %v890, %v1150
    %v1152 = vrcp.pop %v1093
    %v1153 = vmul.f32 %v891, %v1152
    %v1154 = vrcp.pop %v1097
    %v1155 = vmul.f32 %v892, %v1154
    %v1156 = vrcp.pop %v1101
    %v1157 = vmul.f32 %v893, %v1156
    %v1158 = vrcp.pop %v1105
    %v1159 = vmul.f32 %v894, %v1158
    %v1160 = vrcp.pop %v1109
    %v1161 = vmul.f32 %v895, %v1160
    %v1162 = vrcp.pop %v1113
    %v1163 = vmul.f32 %v896, %v1162
    %v1164 = vrcp.pop %v1117
    %v1165 = vmul.f32 %v897, %v1164
    %1167 = vset.pattern.permute.xlu0 0
    %1168 = vperm.xlu0 %1167, %v1135
    %v1169 = vpop.permute.xlu0 %1168
    %1172 = vset.pattern.permute.xlu0 0
    %1173 = vperm.xlu0 %1172, %v1137
    %v1174 = vpop.permute.xlu0 %1173
    %1177 = vset.pattern.permute.xlu0 0
    %1178 = vperm.xlu0 %1177, %v1139
    %v1179 = vpop.permute.xlu0 %1178
    %1182 = vset.pattern.permute.xlu0 0
    %1183 = vperm.xlu0 %1182, %v1141
    %v1184 = vpop.permute.xlu0 %1183
    %1187 = vset.pattern.permute.xlu0 0
    %1188 = vperm.xlu0 %1187, %v1143
    %v1189 = vpop.permute.xlu0 %1188
    %1192 = vset.pattern.permute.xlu0 0
    %1193 = vperm.xlu0 %1192, %v1145
    %v1194 = vpop.permute.xlu0 %1193
    %1197 = vset.pattern.permute.xlu0 0
    %1198 = vperm.xlu0 %1197, %v1147
    %v1199 = vpop.permute.xlu0 %1198
    %1202 = vset.pattern.permute.xlu0 0
    %1203 = vperm.xlu0 %1202, %v1149
    %v1204 = vpop.permute.xlu0 %1203
    %1207 = vset.pattern.permute.xlu0 0
    %1208 = vperm.xlu0 %1207, %v1151
    %v1209 = vpop.permute.xlu0 %1208
    %1212 = vset.pattern.permute.xlu0 0
    %1213 = vperm.xlu0 %1212, %v1153
    %v1214 = vpop.permute.xlu0 %1213
    %1217 = vset.pattern.permute.xlu0 0
    %1218 = vperm.xlu0 %1217, %v1155
    %v1219 = vpop.permute.xlu0 %1218
    %1222 = vset.pattern.permute.xlu0 0
    %1223 = vperm.xlu0 %1222, %v1157
    %v1224 = vpop.permute.xlu0 %1223
    %1227 = vset.pattern.permute.xlu0 0
    %1228 = vperm.xlu0 %1227, %v1159
    %v1229 = vpop.permute.xlu0 %1228
    %1232 = vset.pattern.permute.xlu0 0
    %1233 = vperm.xlu0 %1232, %v1161
    %v1234 = vpop.permute.xlu0 %1233
    %1237 = vset.pattern.permute.xlu0 0
    %1238 = vperm.xlu0 %1237, %v1163
    %v1239 = vpop.permute.xlu0 %1238
    %1242 = vset.pattern.permute.xlu0 0
    %1243 = vperm.xlu0 %1242, %v1165
    %v1244 = vpop.permute.xlu0 %1243
    %v1246 = vmul.f32 %v1169, %v31
    %v1247 = vmul.f32 %v1174, %v32
    %v1248 = vmul.f32 %v1179, %v33
    %v1249 = vmul.f32 %v1184, %v34
    %v1250 = vmul.f32 %v1189, %v35
    %v1251 = vmul.f32 %v1194, %v36
    %v1252 = vmul.f32 %v1199, %v37
    %v1253 = vmul.f32 %v1204, %v38
    %v1254 = vmul.f32 %v1209, %v39
    %v1255 = vmul.f32 %v1214, %v40
    %v1256 = vmul.f32 %v1219, %v41
    %v1257 = vmul.f32 %v1224, %v42
    %v1258 = vmul.f32 %v1229, %v43
    %v1259 = vmul.f32 %v1234, %v44
    %v1260 = vmul.f32 %v1239, %v45
    %v1261 = vmul.f32 %v1244, %v46
    %v1262 = vsel %vm247, %v1246, 0.0
    %v1263 = vrot.slane %v1262, 4
    %v1264 = vadd.f32 %v1262, %v1263
    %v1265 = vrot.slane %v1264, 2
    %v1266 = vadd.f32 %v1264, %v1265
    %v1267 = vrot.slane %v1266, 1
    %v1268 = vadd.f32 %v1266, %v1267
    %v1269 = vsel %vm247, %v1247, 0.0
    %v1270 = vrot.slane %v1269, 4
    %v1271 = vadd.f32 %v1269, %v1270
    %v1272 = vrot.slane %v1271, 2
    %v1273 = vadd.f32 %v1271, %v1272
    %v1274 = vrot.slane %v1273, 1
    %v1275 = vadd.f32 %v1273, %v1274
    %v1276 = vsel %vm247, %v1248, 0.0
    %v1277 = vrot.slane %v1276, 4
    %v1278 = vadd.f32 %v1276, %v1277
    %v1279 = vrot.slane %v1278, 2
    %v1280 = vadd.f32 %v1278, %v1279
    %v1281 = vrot.slane %v1280, 1
    %v1282 = vadd.f32 %v1280, %v1281
    %v1283 = vsel %vm247, %v1249, 0.0
    %v1284 = vrot.slane %v1283, 4
    %v1285 = vadd.f32 %v1283, %v1284
    %v1286 = vrot.slane %v1285, 2
    %v1287 = vadd.f32 %v1285, %v1286
    %v1288 = vrot.slane %v1287, 1
    %v1289 = vadd.f32 %v1287, %v1288
    %v1290 = vsel %vm247, %v1250, 0.0
    %v1291 = vrot.slane %v1290, 4
    %v1292 = vadd.f32 %v1290, %v1291
    %v1293 = vrot.slane %v1292, 2
    %v1294 = vadd.f32 %v1292, %v1293
    %v1295 = vrot.slane %v1294, 1
    %v1296 = vadd.f32 %v1294, %v1295
    %v1297 = vsel %vm247, %v1251, 0.0
    %v1298 = vrot.slane %v1297, 4
    %v1299 = vadd.f32 %v1297, %v1298
    %v1300 = vrot.slane %v1299, 2
    %v1301 = vadd.f32 %v1299, %v1300
    %v1302 = vrot.slane %v1301, 1
    %v1303 = vadd.f32 %v1301, %v1302
    %v1304 = vsel %vm247, %v1252, 0.0
    %v1305 = vrot.slane %v1304, 4
    %v1306 = vadd.f32 %v1304, %v1305
    %v1307 = vrot.slane %v1306, 2
    %v1308 = vadd.f32 %v1306, %v1307
    %v1309 = vrot.slane %v1308, 1
    %v1310 = vadd.f32 %v1308, %v1309
    %v1311 = vsel %vm247, %v1253, 0.0
    %v1312 = vrot.slane %v1311, 4
    %v1313 = vadd.f32 %v1311, %v1312
    %v1314 = vrot.slane %v1313, 2
    %v1315 = vadd.f32 %v1313, %v1314
    %v1316 = vrot.slane %v1315, 1
    %v1317 = vadd.f32 %v1315, %v1316
    %v1318 = vsel %vm247, %v1254, 0.0
    %v1319 = vrot.slane %v1318, 4
    %v1320 = vadd.f32 %v1318, %v1319
    %v1321 = vrot.slane %v1320, 2
    %v1322 = vadd.f32 %v1320, %v1321
    %v1323 = vrot.slane %v1322, 1
    %v1324 = vadd.f32 %v1322, %v1323
    %v1325 = vsel %vm247, %v1255, 0.0
    %v1326 = vrot.slane %v1325, 4
    %v1327 = vadd.f32 %v1325, %v1326
    %v1328 = vrot.slane %v1327, 2
    %v1329 = vadd.f32 %v1327, %v1328
    %v1330 = vrot.slane %v1329, 1
    %v1331 = vadd.f32 %v1329, %v1330
    %v1332 = vsel %vm247, %v1256, 0.0
    %v1333 = vrot.slane %v1332, 4
    %v1334 = vadd.f32 %v1332, %v1333
    %v1335 = vrot.slane %v1334, 2
    %v1336 = vadd.f32 %v1334, %v1335
    %v1337 = vrot.slane %v1336, 1
    %v1338 = vadd.f32 %v1336, %v1337
    %v1339 = vsel %vm247, %v1257, 0.0
    %v1340 = vrot.slane %v1339, 4
    %v1341 = vadd.f32 %v1339, %v1340
    %v1342 = vrot.slane %v1341, 2
    %v1343 = vadd.f32 %v1341, %v1342
    %v1344 = vrot.slane %v1343, 1
    %v1345 = vadd.f32 %v1343, %v1344
    %v1346 = vsel %vm247, %v1258, 0.0
    %v1347 = vrot.slane %v1346, 4
    %v1348 = vadd.f32 %v1346, %v1347
    %v1349 = vrot.slane %v1348, 2
    %v1350 = vadd.f32 %v1348, %v1349
    %v1351 = vrot.slane %v1350, 1
    %v1352 = vadd.f32 %v1350, %v1351
    %v1353 = vsel %vm247, %v1259, 0.0
    %v1354 = vrot.slane %v1353, 4
    %v1355 = vadd.f32 %v1353, %v1354
    %v1356 = vrot.slane %v1355, 2
    %v1357 = vadd.f32 %v1355, %v1356
    %v1358 = vrot.slane %v1357, 1
    %v1359 = vadd.f32 %v1357, %v1358
    %v1360 = vsel %vm247, %v1260, 0.0
    %v1361 = vrot.slane %v1360, 4
    %v1362 = vadd.f32 %v1360, %v1361
    %v1363 = vrot.slane %v1362, 2
    %v1364 = vadd.f32 %v1362, %v1363
    %v1365 = vrot.slane %v1364, 1
    %v1366 = vadd.f32 %v1364, %v1365
    %v1367 = vsel %vm247, %v1261, 0.0
    %v1368 = vrot.slane %v1367, 4
    %v1369 = vadd.f32 %v1367, %v1368
    %v1370 = vrot.slane %v1369, 2
    %v1371 = vadd.f32 %v1369, %v1370
    %v1372 = vrot.slane %v1371, 1
    %v1373 = vadd.f32 %v1371, %v1372
    %v1390 = vsel %vm572, %v1275, %v1268
    %v1391 = vsel %vm574, %v1282, %v1390
    %v1392 = vsel %vm576, %v1289, %v1391
    %v1393 = vsel %vm578, %v1296, %v1392
    %v1394 = vsel %vm580, %v1303, %v1393
    %v1395 = vsel %vm582, %v1310, %v1394
    %v1396 = vsel %vm584, %v1317, %v1395
    %v1397 = vsel %vm572, %v1331, %v1324
    %v1398 = vsel %vm574, %v1338, %v1397
    %v1399 = vsel %vm576, %v1345, %v1398
    %v1400 = vsel %vm578, %v1352, %v1399
    %v1401 = vsel %vm580, %v1359, %v1400
    %v1402 = vsel %vm582, %v1366, %v1401
    %v1403 = vsel %vm584, %v1373, %v1402
    %1406 = vst.msk [vmem:[#allocation5] sm:$0xff] %vm247, %v1396
    %1407 = vst.msk [vmem:[#allocation5 + $0x8] sm:$0xff] %vm247, %v1403
    %v1408 = vlaneseq
    %v1409 = vshrl.u32 %v1408, 7
    %v1410 = vsub.s32 %v507, %v1409
    %v1411 = vrot.slane %v1169, %v1410
    %v1412 = vlaneseq
    %v1413 = vshrl.u32 %v1412, 7
    %v1414 = vsub.s32 %v507, %v1413
    %v1415 = vrot.slane %v1174, %v1414
    %v1416 = vlaneseq
    %v1417 = vshrl.u32 %v1416, 7
    %v1418 = vsub.s32 %v507, %v1417
    %v1419 = vrot.slane %v1179, %v1418
    %v1420 = vlaneseq
    %v1421 = vshrl.u32 %v1420, 7
    %v1422 = vsub.s32 %v507, %v1421
    %v1423 = vrot.slane %v1184, %v1422
    %v1424 = vlaneseq
    %v1425 = vshrl.u32 %v1424, 7
    %v1426 = vsub.s32 %v507, %v1425
    %v1427 = vrot.slane %v1189, %v1426
    %v1428 = vlaneseq
    %v1429 = vshrl.u32 %v1428, 7
    %v1430 = vsub.s32 %v507, %v1429
    %v1431 = vrot.slane %v1194, %v1430
    %v1432 = vlaneseq
    %v1433 = vshrl.u32 %v1432, 7
    %v1434 = vsub.s32 %v507, %v1433
    %v1435 = vrot.slane %v1199, %v1434
    %v1436 = vlaneseq
    %v1437 = vshrl.u32 %v1436, 7
    %v1438 = vsub.s32 %v507, %v1437
    %v1439 = vrot.slane %v1204, %v1438
    %v1440 = vlaneseq
    %v1441 = vshrl.u32 %v1440, 7
    %v1442 = vsub.s32 %v507, %v1441
    %v1443 = vrot.slane %v1209, %v1442
    %v1444 = vlaneseq
    %v1445 = vshrl.u32 %v1444, 7
    %v1446 = vsub.s32 %v507, %v1445
    %v1447 = vrot.slane %v1214, %v1446
    %v1448 = vlaneseq
    %v1449 = vshrl.u32 %v1448, 7
    %v1450 = vsub.s32 %v507, %v1449
    %v1451 = vrot.slane %v1219, %v1450
    %v1452 = vlaneseq
    %v1453 = vshrl.u32 %v1452, 7
    %v1454 = vsub.s32 %v507, %v1453
    %v1455 = vrot.slane %v1224, %v1454
    %v1456 = vlaneseq
    %v1457 = vshrl.u32 %v1456, 7
    %v1458 = vsub.s32 %v507, %v1457
    %v1459 = vrot.slane %v1229, %v1458
    %v1460 = vlaneseq
    %v1461 = vshrl.u32 %v1460, 7
    %v1462 = vsub.s32 %v507, %v1461
    %v1463 = vrot.slane %v1234, %v1462
    %v1464 = vlaneseq
    %v1465 = vshrl.u32 %v1464, 7
    %v1466 = vsub.s32 %v507, %v1465
    %v1467 = vrot.slane %v1239, %v1466
    %v1468 = vlaneseq
    %v1469 = vshrl.u32 %v1468, 7
    %v1470 = vsub.s32 %v507, %v1469
    %v1471 = vrot.slane %v1244, %v1470
    %v1472 = vsel %vm572, %v1415, %v1411
    %v1473 = vsel %vm574, %v1419, %v1472
    %v1474 = vsel %vm576, %v1423, %v1473
    %v1475 = vsel %vm578, %v1427, %v1474
    %v1476 = vsel %vm580, %v1431, %v1475
    %v1477 = vsel %vm582, %v1435, %v1476
    %v1478 = vsel %vm584, %v1439, %v1477
    %v1479 = vsel %vm572, %v1447, %v1443
    %v1480 = vsel %vm574, %v1451, %v1479
    %v1481 = vsel %vm576, %v1455, %v1480
    %v1482 = vsel %vm578, %v1459, %v1481
    %v1483 = vsel %vm580, %v1463, %v1482
    %v1484 = vsel %vm582, %v1467, %v1483
    %v1485 = vsel %vm584, %v1471, %v1484
    %1488 = vst.msk [vmem:[%s4] sm:$0xff] %vm595, %v1478
    %1489 = vst.msk [vmem:[%s4 + $0x8] sm:$0xff] %vm595, %v1485
    // Predicated region
    $region18: #{tpu_custom_call.1} parent=1 // pred_check
      _
    $region19: #{tpu_custom_call.1} parent=1 // pred_check_branch
      %1491 = sbr.rel (0) target = $region21
    $region20: #{tpu_custom_call.1} parent=1 // pred_region
      %s1493 = ssub.s32 256, 256
      %1494 = vsyncadd [#allocation4], %s1493
      %s1495 = sshll.u32 [#allocation5], 4
      %s1496 = int_to_ptr.vmem [resolvable:$true] %s1495
      %1501 = dma.vmem_to_hbm [thread:$0]  %s1496, 256, %s3, [#allocation4], 128, 128, 8
    $region21: #{tpu_custom_call.1} parent=1 // pred_fallthru
      _
    // Predicated region
    $region22: #{tpu_custom_call.1} parent=1 // pred_check
      _
    $region23: #{tpu_custom_call.1} parent=1 // pred_check_branch
      %1503 = sbr.rel (0) target = $region25
    $region24: #{tpu_custom_call.1} parent=1 // pred_region
      _
    $region25: #{tpu_custom_call.1} parent=1 // pred_fallthru
      _
    // Predicated region
    $region26: #{tpu_custom_call.1} parent=1 // pred_check
      _
    $region27: #{tpu_custom_call.1} parent=1 // pred_check_branch
      %1505 = sbr.rel (0) target = $region29
    $region28: #{tpu_custom_call.1} parent=1 // pred_region
      %1506 = dma.done [#allocation4], 256
    $region29: #{tpu_custom_call.1} parent=1 // pred_fallthru
      _
    // Predicated region
    $region30: #{tpu_custom_call.1} parent=1 // pred_check
      _
    $region31: #{tpu_custom_call.1} parent=1 // pred_check_branch
      %1508 = sbr.rel (0) target = $region33
    $region32: #{tpu_custom_call.1} parent=1 // pred_region
      _
    $region33: #{tpu_custom_call.1} parent=1 // pred_fallthru
      _
    %1509 = vsyncpa [#allocation3], 1
    %1510 = vsyncpa [#allocation4], 1

</llo_original>
